<compile_context>
chip_gen: v7x
topology: tpu7x:2x2x1
jax: 0.10.0
libtpu: 0.0.40
codegen_flags: <defaults>
</compile_context>

<pallas_src>
import math

import jax
import jax.numpy as jnp
from jax import lax
from jax.experimental import pallas as pl
from jax.experimental.pallas import tpu as pltpu


# --------------------------- in-kernel helpers ---------------------------

def _layernorm(x, g, b, eps=1e-5):
    mu = jnp.mean(x, axis=-1, keepdims=True)
    xc = x - mu
    var = jnp.mean(xc * xc, axis=-1, keepdims=True)
    return xc * lax.rsqrt(var + eps) * g + b


def _gelu_exact(x):
    # F.gelu default (exact, erf-based)
    return 0.5 * x * (1.0 + lax.erf(x * (1.0 / math.sqrt(2.0))))


# --------------------- fused patch-embedding kernel ---------------------

def make_embed_kernel(B, N, S):
    """Patch projection matmul + bias + CLS prepend + pos-embed; out = flat (B*S, D)."""
    def kernel(p_ref, w_ref, pb_ref, cls_ref, pos_ref, o_ref):
        # p_ref: (B*N, patch_dim) bf16 ; w_ref: (patch_dim, D) bf16
        proj = jnp.dot(p_ref[...], w_ref[...],
                       preferred_element_type=jnp.float32) + pb_ref[...]
        cls_row = cls_ref[...] + pos_ref[:1, :]               # (1, D)
        pos_patch = pos_ref[1:, :]                            # (N, D)
        for b in range(B):
            o_ref[b * S:b * S + 1, :] = cls_row
            o_ref[b * S + 1:(b + 1) * S, :] = proj[b * N:(b + 1) * N, :] + pos_patch
    return kernel


# ---------------- fused multi-layer transformer encoder kernel ----------------

def make_fused_encoder_kernel(num_heads, B, S):
    def kernel(x_ref,
               ln1g, ln1b, wqkv, bqkv, wo, bo,
               ln2g, ln2b, w1, b1, w2, b2,
               ng, nb,
               o_ref,
               act_ref, qkv_ref, attn_ref):
        l = pl.program_id(0)
        D = act_ref.shape[1]
        dh = D // num_heads
        scale = 1.0 / math.sqrt(dh)

        @pl.when(l == 0)
        def _init():
            act_ref[...] = x_ref[...]

        x = act_ref[...]                                      # (B*S, D) f32

        # ---------- self-attention block (pre-LN, residual) ----------
        h = _layernorm(x, ln1g[0], ln1b[0])
        qkv_ref[...] = (jnp.dot(h.astype(jnp.bfloat16), wqkv[0],
                                preferred_element_type=jnp.float32) + bqkv[0])

        # Static loops over batch and heads; each head's (S, dh) result is
        # written straight into its slot of the attention scratch (no concat).
        # TODO(synk): for dh >= 128 replace with head-batched einsum contractions.
        for b in range(B):
            r0, r1 = b * S, (b + 1) * S
            for hd in range(num_heads):
                c0, c1 = hd * dh, (hd + 1) * dh
                qh = qkv_ref[r0:r1, c0:c1].astype(jnp.bfloat16)
                kh = qkv_ref[r0:r1, D + c0:D + c1].astype(jnp.bfloat16)
                vh = qkv_ref[r0:r1, 2 * D + c0:2 * D + c1].astype(jnp.bfloat16)
                # q @ k^T without an explicit transpose (contract last dims).
                s = lax.dot_general(qh, kh, (((1,), (1,)), ((), ())),
                                    preferred_element_type=jnp.float32) * scale
                s = s - jnp.max(s, axis=-1, keepdims=True)
                p = jnp.exp(s)
                p = p * pl.reciprocal(jnp.sum(p, axis=-1, keepdims=True), approx=True)
                attn_ref[r0:r1, c0:c1] = jnp.dot(p.astype(jnp.bfloat16), vh,
                                                 preferred_element_type=jnp.float32)

        attn = (jnp.dot(attn_ref[...].astype(jnp.bfloat16), wo[0],
                        preferred_element_type=jnp.float32) + bo[0])
        x = x + attn

        # ---------- feed-forward block (pre-LN, residual) ----------
        h2 = _layernorm(x, ln2g[0], ln2b[0])
        f = jnp.dot(h2.astype(jnp.bfloat16), w1[0],
                    preferred_element_type=jnp.float32) + b1[0]
        f = _gelu_exact(f)
        f = jnp.dot(f.astype(jnp.bfloat16), w2[0],
                    preferred_element_type=jnp.float32) + b2[0]
        x = x + f

        act_ref[...] = x

        # ---------- final LayerNorm on the CLS rows only (last layer) ----------
        @pl.when(l == pl.num_programs(0) - 1)
        def _final():
            for b in range(B):
                cls = x[b * S:b * S + 1, :]
                o_ref[b:b + 1, :] = _layernorm(cls, ng[...], nb[...])
    return kernel


def cls_norm_kernel(x_ref, g_ref, b_ref, o_ref):
    o_ref[...] = _layernorm(x_ref[...], g_ref[...], b_ref[...])


# ------------------------------ module wrapper ------------------------------

class EncoderViTPallas:
    def __init__(self, grid_shape, patch_size, num_colors, embed_dim, depth, heads, key):
        self.grid_h, self.grid_w = grid_shape
        self.patch_size = patch_size
        self.num_colors = num_colors
        self.embed_dim = embed_dim
        self.heads = heads
        self.depth = max(1, depth) if depth > 0 else 0
        self.input_channels = num_colors * 2
        self.pad_h = (patch_size - self.grid_h % patch_size) % patch_size
        self.pad_w = (patch_size - self.grid_w % patch_size) % patch_size
        self.padded_h = self.grid_h + self.pad_h
        self.padded_w = self.grid_w + self.pad_w
        self.num_patches_h = self.padded_h // patch_size
        self.num_patches_w = self.padded_w // patch_size
        self.num_patches = self.num_patches_h * self.num_patches_w
        if self.padded_h < patch_size or self.padded_w < patch_size:
            self.num_patches = 0

        D = embed_dim
        Dff = 4 * D
        L = self.depth
        patch_dim = self.input_channels * patch_size * patch_size
        n_eff = max(0, self.num_patches)
        self.seq_len = n_eff + 1
        S = self.seq_len

        keys = jax.random.split(key, 8)

        def rnd(k, shape, scale=0.02):
            return (scale * jax.random.normal(k, shape)).astype(jnp.float32)

        # patch projection (Conv2d k=s=patch_size) flattened to a matmul (bf16 weights)
        conv_w = rnd(keys[0], (D, self.input_channels, patch_size, patch_size))
        self.patch_w = conv_w.reshape(D, patch_dim).T.astype(jnp.bfloat16)   # (patch_dim, D)
        self.patch_b = jnp.zeros((1, D), jnp.float32)

        self.cls_token = rnd(keys[1], (1, D))
        self.pos_embed = rnd(keys[2], (S, D))

        # transformer stack: per-layer params stacked along a leading depth axis
        if L > 0:
            self.ln1_g = jnp.ones((L, 1, D), jnp.float32)
            self.ln1_b = jnp.zeros((L, 1, D), jnp.float32)
            self.wqkv = rnd(keys[3], (L, D, 3 * D)).astype(jnp.bfloat16)     # fused Wq|Wk|Wv
            self.bqkv = jnp.zeros((L, 1, 3 * D), jnp.float32)
            self.wo = rnd(keys[4], (L, D, D)).astype(jnp.bfloat16)
            self.bo = jnp.zeros((L, 1, D), jnp.float32)
            self.ln2_g = jnp.ones((L, 1, D), jnp.float32)
            self.ln2_b = jnp.zeros((L, 1, D), jnp.float32)
            self.w1 = rnd(keys[5], (L, D, Dff)).astype(jnp.bfloat16)
            self.b1 = jnp.zeros((L, 1, Dff), jnp.float32)
            self.w2 = rnd(keys[6], (L, Dff, D)).astype(jnp.bfloat16)
            self.b2 = jnp.zeros((L, 1, D), jnp.float32)

        # final LayerNorm
        self.norm_g = jnp.ones((1, D), jnp.float32)
        self.norm_b = jnp.zeros((1, D), jnp.float32)

        # TODO(synk): attention-weight forward hooks and feature-map caching from the
        # PyTorch module are host-side bookkeeping and are not replicated here.

    def _cls_norm(self, x2d):
        return pl.pallas_call(
            cls_norm_kernel,
            out_shape=jax.ShapeDtypeStruct(x2d.shape, jnp.float32),
        )(x2d.astype(jnp.float32), self.norm_g, self.norm_b)

    def __call__(self, x0, x1):
        B = x0.shape[0]
        C = self.num_colors
        D = self.embed_dim
        p = self.patch_size

        if self.num_patches == 0:
            cls = jnp.broadcast_to(self.cls_token + self.pos_embed[:1, :], (B, D))
            return self._cls_norm(cls)

        # --- one-hot (NCHW, bf16), pad, concat (cheap XLA glue) ---
        x0_oh = jnp.transpose(jax.nn.one_hot(jnp.clip(x0, 0, C - 1), C,
                                             dtype=jnp.bfloat16), (0, 3, 1, 2))
        x1_oh = jnp.transpose(jax.nn.one_hot(jnp.clip(x1, 0, C - 1), C,
                                             dtype=jnp.bfloat16), (0, 3, 1, 2))
        if self.pad_h > 0 or self.pad_w > 0:
            pads = ((0, 0), (0, 0), (0, self.pad_h), (0, self.pad_w))
            x0_oh = jnp.pad(x0_oh, pads)
            x1_oh = jnp.pad(x1_oh, pads)
        x_pair = jnp.concatenate((x0_oh, x1_oh), axis=1)      # (B, 2C, Hp, Wp)

        # --- extract non-overlapping patches, flatten in Conv2d (c, kh, kw) order ---
        nph, npw = self.num_patches_h, self.num_patches_w
        N = self.num_patches
        S = self.seq_len
        patches = x_pair.reshape(B, 2 * C, nph, p, npw, p)
        patches = jnp.transpose(patches, (0, 2, 4, 1, 3, 5))
        patches = patches.reshape(B * N, 2 * C * p * p)       # (B*N, patch_dim) bf16

        # --- fused patch projection + bias + CLS + pos-embed -> flat (B*S, D) ---
        x_flat = pl.pallas_call(
            make_embed_kernel(B, N, S),
            out_shape=jax.ShapeDtypeStruct((B * S, D), jnp.float32),
        )(patches, self.patch_w, self.patch_b, self.cls_token, self.pos_embed)

        if self.depth == 0:   # transformer is identity -> just norm the CLS rows
            cls = x_flat.reshape(B, S, D)[:, 0, :]
            return self._cls_norm(cls)

        # --- whole transformer stack + final CLS LayerNorm in ONE pallas_call ---
        L = self.depth
        Dff = 4 * D
        e = pl.pallas_call(
            make_fused_encoder_kernel(self.heads, B, S),
            out_shape=jax.ShapeDtypeStruct((B, D), jnp.float32),
            grid=(L,),
            in_specs=[
                pl.BlockSpec((B * S, D), lambda l: (0, 0)),        # x (loaded once)
                pl.BlockSpec((1, 1, D), lambda l: (l, 0, 0)),      # ln1_g
                pl.BlockSpec((1, 1, D), lambda l: (l, 0, 0)),      # ln1_b
                pl.BlockSpec((1, D, 3 * D), lambda l: (l, 0, 0)),  # wqkv
                pl.BlockSpec((1, 1, 3 * D), lambda l: (l, 0, 0)),  # bqkv
                pl.BlockSpec((1, D, D), lambda l: (l, 0, 0)),      # wo
                pl.BlockSpec((1, 1, D), lambda l: (l, 0, 0)),      # bo
                pl.BlockSpec((1, 1, D), lambda l: (l, 0, 0)),      # ln2_g
                pl.BlockSpec((1, 1, D), lambda l: (l, 0, 0)),      # ln2_b
                pl.BlockSpec((1, D, Dff), lambda l: (l, 0, 0)),    # w1
                pl.BlockSpec((1, 1, Dff), lambda l: (l, 0, 0)),    # b1
                pl.BlockSpec((1, Dff, D), lambda l: (l, 0, 0)),    # w2
                pl.BlockSpec((1, 1, D), lambda l: (l, 0, 0)),      # b2
                pl.BlockSpec((1, D), lambda l: (0, 0)),            # final norm gamma
                pl.BlockSpec((1, D), lambda l: (0, 0)),            # final norm beta
            ],
            out_specs=pl.BlockSpec((B, D), lambda l: (0, 0)),
            scratch_shapes=[
                pltpu.VMEM((B * S, D), jnp.float32),       # resident activations
                pltpu.VMEM((B * S, 3 * D), jnp.float32),   # fused QKV
                pltpu.VMEM((B * S, D), jnp.float32),       # attention output
            ],
            compiler_params=pltpu.CompilerParams(
                dimension_semantics=("arbitrary",)),
        )(x_flat, self.ln1_g, self.ln1_b, self.wqkv, self.bqkv, self.wo, self.bo,
          self.ln2_g, self.ln2_b, self.w1, self.b1, self.w2, self.b2,
          self.norm_g, self.norm_b)
        return e


if __name__ == "__main__":
    key = jax.random.PRNGKey(0)
    grid_shape = (7, 7)     # padded to 8x8 -> 2x2 = 4 patches, seq len 5
    patch_size = 4
    num_colors = 4          # input_channels = 8, patch_dim = 128
    embed_dim = 32
    depth = 2
    heads = 4
    B = 2

    k0, k1, kparams = jax.random.split(key, 3)
    x0 = jax.random.randint(k0, (B,) + grid_shape, 0, num_colors, dtype=jnp.int32)
    x1 = jax.random.randint(k1, (B,) + grid_shape, 0, num_colors, dtype=jnp.int32)

    enc = EncoderViTPallas(grid_shape, patch_size, num_colors, embed_dim, depth, heads, kparams)
    e = enc(x0, x1)
    e = jax.block_until_ready(e)
    assert e.shape == (B, embed_dim), e.shape
    assert e.dtype == jnp.float32
    print("KERNEL_OK")
</pallas_src>

<mosaic_0001>
module attributes {stable_mosaic.version = 11 : i64} {
  func.func @kernel(%arg0: memref<8x128xbf16, #tpu.memory_space<vmem>>, %arg1: memref<128x32xbf16, #tpu.memory_space<vmem>>, %arg2: memref<1x32xf32, #tpu.memory_space<vmem>>, %arg3: memref<1x32xf32, #tpu.memory_space<vmem>>, %arg4: memref<5x32xf32, #tpu.memory_space<vmem>>, %arg5: memref<10x32xf32, #tpu.memory_space<vmem>>) attributes {dimension_semantics = [], scalar_prefetch = 0 : i64, scratch_operands = 0 : i64, tpu.core_type = #tpu.core_type<tc>} {
    %c0 = arith.constant 0 : index
    %c0_0 = arith.constant 0 : index
    %0 = vector.load %arg0[%c0, %c0_0] : memref<8x128xbf16, #tpu.memory_space<vmem>>, vector<8x128xbf16>
    %c0_1 = arith.constant 0 : index
    %c0_2 = arith.constant 0 : index
    %1 = vector.load %arg1[%c0_1, %c0_2] : memref<128x32xbf16, #tpu.memory_space<vmem>>, vector<128x32xbf16>
    %cst = arith.constant dense<0.000000e+00> : vector<8x32xf32>
    %2 = tpu.matmul %0, %1, %cst {dimension_numbers = #tpu.dot_dimension_numbers<[1], [0], [0], [1], [0, 0, 1, 1], [], []>} : vector<8x128xbf16>, vector<128x32xbf16>, vector<8x32xf32> -> vector<8x32xf32>
    %c0_3 = arith.constant 0 : index
    %c0_4 = arith.constant 0 : index
    %3 = vector.load %arg2[%c0_3, %c0_4] : memref<1x32xf32, #tpu.memory_space<vmem>>, vector<1x32xf32>
    %4 = vector.broadcast %3 : vector<1x32xf32> to vector<8x32xf32>
    %5 = arith.addf %2, %4 : vector<8x32xf32>
    %c0_5 = arith.constant 0 : index
    %c0_6 = arith.constant 0 : index
    %6 = vector.load %arg3[%c0_5, %c0_6] : memref<1x32xf32, #tpu.memory_space<vmem>>, vector<1x32xf32>
    %c0_7 = arith.constant 0 : index
    %c0_8 = arith.constant 0 : index
    %7 = vector.load %arg4[%c0_7, %c0_8] : memref<5x32xf32, #tpu.memory_space<vmem>>, vector<1x32xf32>
    %8 = arith.addf %6, %7 : vector<1x32xf32>
    %c1 = arith.constant 1 : index
    %c0_9 = arith.constant 0 : index
    %9 = vector.load %arg4[%c1, %c0_9] : memref<5x32xf32, #tpu.memory_space<vmem>>, vector<4x32xf32>
    %c0_10 = arith.constant 0 : index
    %c0_11 = arith.constant 0 : index
    %10 = vector.load %arg5[%c0_10, %c0_11] : memref<10x32xf32, #tpu.memory_space<vmem>>, vector<1x32xf32>
    tpu.vector_store %arg5[%c0_10, %c0_11], %8 {strides = array<i32>} : memref<10x32xf32, #tpu.memory_space<vmem>>, vector<1x32xf32>,
    %11 = vector.extract_strided_slice %5 {offsets = [0, 0], sizes = [4, 32], strides = [1, 1]} : vector<8x32xf32> to vector<4x32xf32>
    %12 = arith.addf %11, %9 : vector<4x32xf32>
    %c1_12 = arith.constant 1 : index
    %c0_13 = arith.constant 0 : index
    %13 = vector.load %arg5[%c1_12, %c0_13] : memref<10x32xf32, #tpu.memory_space<vmem>>, vector<4x32xf32>
    tpu.vector_store %arg5[%c1_12, %c0_13], %12 {strides = array<i32>} : memref<10x32xf32, #tpu.memory_space<vmem>>, vector<4x32xf32>,
    %c5 = arith.constant 5 : index
    %c0_14 = arith.constant 0 : index
    %14 = vector.load %arg5[%c5, %c0_14] : memref<10x32xf32, #tpu.memory_space<vmem>>, vector<1x32xf32>
    tpu.vector_store %arg5[%c5, %c0_14], %8 {strides = array<i32>} : memref<10x32xf32, #tpu.memory_space<vmem>>, vector<1x32xf32>,
    %15 = vector.extract_strided_slice %5 {offsets = [4, 0], sizes = [4, 32], strides = [1, 1]} : vector<8x32xf32> to vector<4x32xf32>
    %16 = arith.addf %15, %9 : vector<4x32xf32>
    %c6 = arith.constant 6 : index
    %c0_15 = arith.constant 0 : index
    %17 = vector.load %arg5[%c6, %c0_15] : memref<10x32xf32, #tpu.memory_space<vmem>>, vector<4x32xf32>
    tpu.vector_store %arg5[%c6, %c0_15], %16 {strides = array<i32>} : memref<10x32xf32, #tpu.memory_space<vmem>>, vector<4x32xf32>,
    return
  }
}

</mosaic_0001>

<llo_original>
// kernel: tpu_custom_call.1
$region0: #{tpu_custom_call.1}
  #allocation0 [shape = 'u32[]', space=smem, size = 0x4, offset = 0x4, fixed_abs, tag = 'smem constant byte address 0x4 - core index']
  #allocation1 [shape = 'u32[144,128]{1,0:T(1,128)}', space=vmem, size = 0x12000, scoped, tag = 'internal scratch']
  %s0 = inlined_call_operand.vmem [shape: bf16[8,128], index: 0, kind: input, shape index: {}]
  %s1 = inlined_call_operand.vmem [shape: bf16[128,32], index: 1, kind: input, shape index: {}]
  %s2 = inlined_call_operand.vmem [shape: f32[1,32], index: 2, kind: input, shape index: {}]
  %s3 = inlined_call_operand.vmem [shape: f32[1,32], index: 3, kind: input, shape index: {}]
  %s4 = inlined_call_operand.vmem [shape: f32[5,32], index: 4, kind: input, shape index: {}]
  %s5 = inlined_call_operand.hbm [shape: f32[10,32], index: 5, kind: output, shape index: {}]
  %s6 = sld [smem:[#allocation0]]
  $region30: #{tpu_custom_call.1} parent=0
    _
  %s8 = ssub.s32 1, %s6
  %s9 = scalar_select 0, %s8, %s6
  $region1: #{tpu_custom_call.1} parent=0
    #allocation2 [shape = 'u8[8192]{0}', space=vmem, size = 0x2000, scoped, tag = 'output window, operand 0, single buffered']
    #allocation3 [shape = 's32[1]{0}', space=sflag, size = 0x4, scoped, tag = 'scoped memory for tpu_custom_call.1']
    %10 = vsyncpa [#allocation3], 0
    // Predicated region
    $region2: #{tpu_custom_call.1} parent=1 // pred_check
      _
    $region3: #{tpu_custom_call.1} parent=1 // pred_check_branch
      %12 = sbr.rel (0) target = $region5
    $region4: #{tpu_custom_call.1} parent=1 // pred_region
      _
    $region5: #{tpu_custom_call.1} parent=1 // pred_fallthru
      _
    // Predicated region
    $region6: #{tpu_custom_call.1} parent=1 // pred_check
      _
    $region7: #{tpu_custom_call.1} parent=1 // pred_check_branch
      %14 = sbr.rel (0) target = $region9
    $region8: #{tpu_custom_call.1} parent=1 // pred_region
      _
    $region9: #{tpu_custom_call.1} parent=1 // pred_fallthru
      _
    // Predicated region
    $region10: #{tpu_custom_call.1} parent=1 // pred_check
      _
    $region11: #{tpu_custom_call.1} parent=1 // pred_check_branch
      %16 = sbr.rel (0) target = $region13
    $region12: #{tpu_custom_call.1} parent=1 // pred_region
      _
    $region13: #{tpu_custom_call.1} parent=1 // pred_fallthru
      _
    // Predicated region
    $region14: #{tpu_custom_call.1} parent=1 // pred_check
      _
    $region15: #{tpu_custom_call.1} parent=1 // pred_check_branch
      %18 = sbr.rel (0) target = $region17
    $region16: #{tpu_custom_call.1} parent=1 // pred_region
      _
    $region17: #{tpu_custom_call.1} parent=1 // pred_fallthru
      _
    // Predicated region
    $region18: #{tpu_custom_call.1} parent=1 // pred_check
      _
    $region19: #{tpu_custom_call.1} parent=1 // pred_check_branch
      %20 = sbr.rel (0) target = $region21
    $region20: #{tpu_custom_call.1} parent=1 // pred_region
      _
    $region21: #{tpu_custom_call.1} parent=1 // pred_fallthru
      _
    %v22 = vld [vmem:[%s0] sm:$0xf]
    %v23 = vld [vmem:[%s1] sm:$0xf]
    %v24 = vld [vmem:[%s1 + $0x4] sm:$0xf]
    %v25 = vld [vmem:[%s1 + $0x8] sm:$0xf]
    %v26 = vld [vmem:[%s1 + $0xc] sm:$0xf]
    %v27 = vld [vmem:[%s1 + $0x10] sm:$0xf]
    %v28 = vld [vmem:[%s1 + $0x14] sm:$0xf]
    %v29 = vld [vmem:[%s1 + $0x18] sm:$0xf]
    %v30 = vld [vmem:[%s1 + $0x1c] sm:$0xf]
    %v31 = vld [vmem:[%s1 + $0x20] sm:$0xf]
    %v32 = vld [vmem:[%s1 + $0x24] sm:$0xf]
    %v33 = vld [vmem:[%s1 + $0x28] sm:$0xf]
    %v34 = vld [vmem:[%s1 + $0x2c] sm:$0xf]
    %v35 = vld [vmem:[%s1 + $0x30] sm:$0xf]
    %v36 = vld [vmem:[%s1 + $0x34] sm:$0xf]
    %v37 = vld [vmem:[%s1 + $0x38] sm:$0xf]
    %v38 = vld [vmem:[%s1 + $0x3c] sm:$0xf]
    %v39 = vld [vmem:[%s2] sm:$0x1]
    %v41 = vlaneseq
    %v42 = vshrl.u32 %v41, 7
    %v43 = vsub.s32 0, %v42
    %v44 = vrot.slane %v39, %v43
    %v62 = vunpack.c.l.b16 %v23
    %v63 = vunpack.c.l.b16 %v24
    %v64 = vunpack.c.l.b16 %v25
    %v65 = vunpack.c.l.b16 %v26
    %v66 = vunpack.c.l.b16 %v27
    %v67 = vunpack.c.l.b16 %v28
    %v68 = vunpack.c.l.b16 %v29
    %v69 = vunpack.c.l.b16 %v30
    %v70 = vunpack.c.l.b16 %v31
    %v71 = vunpack.c.l.b16 %v32
    %v72 = vunpack.c.l.b16 %v33
    %v73 = vunpack.c.l.b16 %v34
    %v74 = vunpack.c.l.b16 %v35
    %v75 = vunpack.c.l.b16 %v36
    %v76 = vunpack.c.l.b16 %v37
    %v77 = vunpack.c.l.b16 %v38
    %v78 = vpack.c.b16 %v63, %v62
    %v79 = vpack.c.b16 %v65, %v64
    %v80 = vpack.c.b16 %v67, %v66
    %v81 = vpack.c.b16 %v69, %v68
    %v82 = vpack.c.b16 %v71, %v70
    %v83 = vpack.c.b16 %v73, %v72
    %v84 = vpack.c.b16 %v75, %v74
    %v85 = vpack.c.b16 %v77, %v76
    %94 = vmatprep.subr.bf16.mxu0 0
    %95 = vmatpush1.bf16.msra.mxu0 %v78
    %96 = vmatprep.subr.bf16.mxu0 0
    %97 = vmatpush1.bf16.msra.mxu0 %v79
    %98 = vmatprep.subr.bf16.mxu0 0
    %99 = vmatpush1.bf16.msra.mxu0 %v80
    %100 = vmatprep.subr.bf16.mxu0 0
    %101 = vmatpush1.bf16.msra.mxu0 %v81
    %102 = vmatprep.subr.bf16.mxu0 0
    %103 = vmatpush1.bf16.msra.mxu0 %v82
    %104 = vmatprep.subr.bf16.mxu0 0
    %105 = vmatpush1.bf16.msra.mxu0 %v83
    %106 = vmatprep.subr.bf16.mxu0 0
    %107 = vmatpush1.bf16.msra.mxu0 %v84
    %108 = vmatprep.subr.bf16.mxu0 0
    %109 = vmatpush1.bf16.msra.mxu0 %v85
    %110 = vmatprep.subr.bf16.mxu0 0
    %111 = vmatpush1.bf16.msra.mxu0 0
    %112 = vmatprep.subr.bf16.mxu0 0
    %113 = vmatpush1.bf16.msra.mxu0 0
    %114 = vmatprep.subr.bf16.mxu0 0
    %115 = vmatpush1.bf16.msra.mxu0 0
    %116 = vmatprep.subr.bf16.mxu0 0
    %117 = vmatpush1.bf16.msra.mxu0 0
    %118 = vmatprep.subr.bf16.mxu0 0
    %119 = vmatpush1.bf16.msra.mxu0 0
    %120 = vmatprep.subr.bf16.mxu0 0
    %121 = vmatpush1.bf16.msra.mxu0 0
    %122 = vmatprep.subr.bf16.mxu0 0
    %123 = vmatpush1.bf16.msra.mxu0 0
    %124 = vmatprep.subr.bf16.mxu0 0
    %125 = vmatpush1.bf16.msra.mxu0 0
    %126 = vmatprep.mubr.bf16.mxu0 0
    %127 = vmatmul.mubr.bf16.gmra.mrb[0].mxu0 %v22
    %v128 = vpop.f32.mrb[0].mxu0
    %v129 = vadd.f32 %v44, %v128
    %v130 = vpop.f32.mrb[0].mxu0
    %v131 = vpop.f32.mrb[0].mxu0
    %v132 = vpop.f32.mrb[0].mxu0
    %133 = vdwg.mxu0
    %v134 = vld [vmem:[%s3] sm:$0x1]
    %v135 = vld [vmem:[%s4] sm:$0x1]
    %v136 = vadd.f32 %v134, %v135
    %v137 = vld [vmem:[%s4 + $0x1] sm:$0xf]
    %vm138 = vcmask 253952
    %139 = vst.msk [vmem:[#allocation2] sm:$0x1] %vm138, %v136
    %v140 = vadd.f32 %v129, %v137
    %vm141 = vcmask 257024
    %142 = vst.msk [vmem:[#allocation2 + $0x1] sm:$0xf] %vm141, %v140
    %143 = vst.msk [vmem:[#allocation2 + $0x5] sm:$0x1] %vm138, %v136
    %v145 = vrot.slane %v137, 4
    %v147 = vadd.f32 %v129, %v145
    %vm148 = vcmask 261124
    %149 = vst.msk [vmem:[#allocation2 + $0x2] sm:$0xf0] %vm148, %v147
    // Predicated region
    $region22: #{tpu_custom_call.1} parent=1 // pred_check
      _
    $region23: #{tpu_custom_call.1} parent=1 // pred_check_branch
      %151 = sbr.rel (0) target = $region25
    $region24: #{tpu_custom_call.1} parent=1 // pred_region
      %s153 = ssub.s32 256, 256
      %154 = vsyncadd [#allocation3], %s153
      %s155 = sshll.u32 [#allocation2], 4
      %s156 = int_to_ptr.vmem [resolvable:$true] %s155
      %161 = dma.vmem_to_hbm [thread:$0]  %s156, 256, %s5, [#allocation3], 128, 128, 8
    $region25: #{tpu_custom_call.1} parent=1 // pred_fallthru
      _
    // Predicated region
    $region26: #{tpu_custom_call.1} parent=1 // pred_check
      _
    $region27: #{tpu_custom_call.1} parent=1 // pred_check_branch
      %163 = sbr.rel (0) target = $region29
    $region28: #{tpu_custom_call.1} parent=1 // pred_region
      %164 = dma.done [#allocation3], 256
    $region29: #{tpu_custom_call.1} parent=1 // pred_fallthru
      _
    %165 = vsyncpa [#allocation3], 1

</llo_original>
